<compile_context>
chip_gen: v6e
topology: v6e:2x2x1
jax: 0.10.0
libtpu: 0.0.40
codegen_flags: <defaults>
</compile_context>

<pallas_src>
import jax
import jax.numpy as jnp
from jax.experimental import pallas as pl
from jax.experimental.pallas import tpu as pltpu

_DIMS = [(66, 128), (128, 64), (64, 32), (32, 1)]
_DEFAULT_BLOCK_ROWS = 4096  # large batch tile: amortizes per-step overhead, ~few MB VMEM


def _round_up(n, m):
    return ((n + m - 1) // m) * m


def _mlp_kernel(x_ref,
                w1_ref, b1_ref,
                w2_ref, b2_ref,
                w3_ref, b3_ref,
                w4_ref, b4_ref,
                o_ref):
    # x tile: (TB, 66) bf16.  All layers fused; activations never leave VMEM.
    x = x_ref[...]

    h1 = jnp.dot(x, w1_ref[...], preferred_element_type=jnp.float32) + b1_ref[...]
    h1 = jnp.maximum(h1, 0.0)

    h2 = jnp.dot(h1.astype(w2_ref.dtype), w2_ref[...],
                 preferred_element_type=jnp.float32) + b2_ref[...]
    h2 = jnp.maximum(h2, 0.0)

    h3 = jnp.dot(h2.astype(w3_ref.dtype), w3_ref[...],
                 preferred_element_type=jnp.float32) + b3_ref[...]
    h3 = jnp.maximum(h3, 0.0)

    # fc4: N=1 output column -> keep it off the MXU.  Elementwise multiply (VPU) by the
    # (1, 32) weight row and a cross-lane sum (XLU), then f32 bias add.
    out = jnp.sum(h3 * w4_ref[...], axis=-1, keepdims=True) + b4_ref[...]
    o_ref[...] = out.astype(o_ref.dtype)


def home_score_nn(x, params, *, block_rows=_DEFAULT_BLOCK_ROWS):
    """Forward pass of HomeScoreNN via one batch-tiled pallas_call.

    x: (batch, 66) float32
    params: dict with w1..w4 stored as (in, out) and b1..b4 as (1, out), all float32
    returns: (batch, 1) float32
    """
    batch, feat = x.shape
    assert feat == 66, f"expected 66 input features, got {feat}"

    # bf16 inputs to the MXU; biases stay f32 (accumulation is f32 everywhere).
    x_bf16 = x.astype(jnp.bfloat16)

    # Batch tile: multiple of 8 sublanes, capped by block_rows; pad batch to a multiple
    # of the tile so every grid step sees a full block.
    tb = min(block_rows, _round_up(batch, 8))
    padded = _round_up(batch, tb)
    if padded != batch:
        x_bf16 = jnp.pad(x_bf16, ((0, padded - batch), (0, 0)))
    grid = (padded // tb,)

    # fc4 weight as a lane-dense (1, 32) row for the VPU reduction.
    w4_row = params["w4"].reshape(1, 32).astype(jnp.float32)

    weight_args = (
        params["w1"].astype(jnp.bfloat16), params["b1"].astype(jnp.float32),
        params["w2"].astype(jnp.bfloat16), params["b2"].astype(jnp.float32),
        params["w3"].astype(jnp.bfloat16), params["b3"].astype(jnp.float32),
        w4_row, params["b4"].astype(jnp.float32),
    )

    # x/out tiles advance along the grid; weights/biases are fetched once and stay
    # resident in VMEM (constant index_map).
    in_specs = [pl.BlockSpec((tb, 66), lambda i: (i, 0))]
    in_specs += [pl.BlockSpec(a.shape, lambda i: (0, 0)) for a in weight_args]
    out_spec = pl.BlockSpec((tb, 1), lambda i: (i, 0))

    flops = 2 * batch * sum(fi * fo for fi, fo in _DIMS)
    bytes_accessed = padded * (66 * 2 + 1 * 4) + sum(
        int(a.size) * a.dtype.itemsize for a in weight_args)

    out = pl.pallas_call(
        _mlp_kernel,
        out_shape=jax.ShapeDtypeStruct((padded, 1), jnp.float32),
        grid=grid,
        in_specs=in_specs,
        out_specs=out_spec,
        compiler_params=pltpu.CompilerParams(
            dimension_semantics=("parallel",),      # batch axis: split across TCs
            vmem_limit_bytes=32 * 1024 * 1024,       # explicit; safe on v5e/v6e/v7x
        ),
        cost_estimate=pl.CostEstimate(
            flops=flops, transcendentals=0, bytes_accessed=bytes_accessed),
    )(x_bf16, *weight_args)

    return out[:batch]


def init_params(key):
    """Deterministic init mimicking PyTorch's default Linear init:
    U(-1/sqrt(fan_in), 1/sqrt(fan_in)) for both weights and biases."""
    params = {}
    keys = jax.random.split(key, 2 * len(_DIMS))
    for i, (fan_in, fan_out) in enumerate(_DIMS):
        bound = 1.0 / jnp.sqrt(jnp.float32(fan_in))
        params[f"w{i + 1}"] = jax.random.uniform(
            keys[2 * i], (fan_in, fan_out), dtype=jnp.float32,
            minval=-bound, maxval=bound)
        params[f"b{i + 1}"] = jax.random.uniform(
            keys[2 * i + 1], (1, fan_out), dtype=jnp.float32,
            minval=-bound, maxval=bound)
    return params


def _reference_f32(x, p):
    h = jnp.maximum(x @ p["w1"] + p["b1"], 0.0)
    h = jnp.maximum(h @ p["w2"] + p["b2"], 0.0)
    h = jnp.maximum(h @ p["w3"] + p["b3"], 0.0)
    return h @ p["w4"] + p["b4"]


def _reference_bf16(x, p):
    """Reference that mirrors the kernel's bf16-input / f32-accumulate numerics."""
    h = jnp.maximum(jnp.dot(x.astype(jnp.bfloat16), p["w1"].astype(jnp.bfloat16),
                            preferred_element_type=jnp.float32) + p["b1"], 0.0)
    h = jnp.maximum(jnp.dot(h.astype(jnp.bfloat16), p["w2"].astype(jnp.bfloat16),
                            preferred_element_type=jnp.float32) + p["b2"], 0.0)
    h = jnp.maximum(jnp.dot(h.astype(jnp.bfloat16), p["w3"].astype(jnp.bfloat16),
                            preferred_element_type=jnp.float32) + p["b3"], 0.0)
    return jnp.sum(h * p["w4"].reshape(1, 32), axis=-1, keepdims=True) + p["b4"]


if __name__ == "__main__":
    key = jax.random.PRNGKey(0)
    k_params, k_x = jax.random.split(key)

    params = init_params(k_params)
    batch = 8
    x = jax.random.normal(k_x, (batch, 66), dtype=jnp.float32)

    out = home_score_nn(x, params)
    out = jax.block_until_ready(out)
    assert out.shape == (batch, 1)

    # Tight check against a reference with identical bf16/f32 mixed numerics.
    ref_bf16 = _reference_bf16(x, params)
    assert jnp.allclose(out, ref_bf16, atol=2e-3, rtol=2e-3)

    # Looser check against the pure-f32 PyTorch-equivalent reference (bf16 inputs).
    ref_f32 = _reference_f32(x, params)
    assert jnp.allclose(out, ref_f32, atol=5e-2, rtol=5e-2)

    print("KERNEL_OK")
</pallas_src>

<mosaic_0001>
module attributes {stable_mosaic.version = 11 : i64} {
  func.func @_mlp_kernel(%arg0: i32, %arg1: memref<8x66xbf16, #tpu.memory_space<vmem>>, %arg2: memref<66x128xbf16, #tpu.memory_space<vmem>>, %arg3: memref<1x128xf32, #tpu.memory_space<vmem>>, %arg4: memref<128x64xbf16, #tpu.memory_space<vmem>>, %arg5: memref<1x64xf32, #tpu.memory_space<vmem>>, %arg6: memref<64x32xbf16, #tpu.memory_space<vmem>>, %arg7: memref<1x32xf32, #tpu.memory_space<vmem>>, %arg8: memref<1x32xf32, #tpu.memory_space<vmem>>, %arg9: memref<1x1xf32, #tpu.memory_space<vmem>>, %arg10: memref<8x1xf32, #tpu.memory_space<vmem>>) attributes {dimension_semantics = [#tpu.dimension_semantics<parallel>], iteration_bounds = array<i64: 1>, scalar_prefetch = 0 : i64, scratch_operands = 0 : i64, tpu.core_type = #tpu.core_type<tc>, window_params = [{transform_indices = @transform_0, window_bounds = array<i64: 8, 66>}, {pipeline_mode = #tpu.pipeline_mode<synchronous>, transform_indices = @transform_1, window_bounds = array<i64: 66, 128>}, {pipeline_mode = #tpu.pipeline_mode<synchronous>, transform_indices = @transform_2, window_bounds = array<i64: 1, 128>}, {pipeline_mode = #tpu.pipeline_mode<synchronous>, transform_indices = @transform_3, window_bounds = array<i64: 128, 64>}, {pipeline_mode = #tpu.pipeline_mode<synchronous>, transform_indices = @transform_4, window_bounds = array<i64: 1, 64>}, {pipeline_mode = #tpu.pipeline_mode<synchronous>, transform_indices = @transform_5, window_bounds = array<i64: 64, 32>}, {pipeline_mode = #tpu.pipeline_mode<synchronous>, transform_indices = @transform_6, window_bounds = array<i64: 1, 32>}, {pipeline_mode = #tpu.pipeline_mode<synchronous>, transform_indices = @transform_7, window_bounds = array<i64: 1, 32>}, {pipeline_mode = #tpu.pipeline_mode<synchronous>, transform_indices = @transform_8, window_bounds = array<i64: 1, 1>}, {transform_indices = @transform_9, window_bounds = array<i64: 8, 1>}]} {
    %c0 = arith.constant 0 : index
    %c0_0 = arith.constant 0 : index
    %0 = vector.load %arg1[%c0, %c0_0] : memref<8x66xbf16, #tpu.memory_space<vmem>>, vector<8x66xbf16>
    %c0_1 = arith.constant 0 : index
    %c0_2 = arith.constant 0 : index
    %1 = vector.load %arg2[%c0_1, %c0_2] : memref<66x128xbf16, #tpu.memory_space<vmem>>, vector<66x128xbf16>
    %cst = arith.constant dense<0.000000e+00> : vector<8x128xf32>
    %2 = tpu.matmul %0, %1, %cst {dimension_numbers = #tpu.dot_dimension_numbers<[1], [0], [0], [1], [0, 0, 1, 1], [], []>} : vector<8x66xbf16>, vector<66x128xbf16>, vector<8x128xf32> -> vector<8x128xf32>
    %c0_3 = arith.constant 0 : index
    %c0_4 = arith.constant 0 : index
    %3 = vector.load %arg3[%c0_3, %c0_4] : memref<1x128xf32, #tpu.memory_space<vmem>>, vector<1x128xf32>
    %4 = vector.broadcast %3 : vector<1x128xf32> to vector<8x128xf32>
    %5 = arith.addf %2, %4 : vector<8x128xf32>
    %cst_5 = arith.constant 0.000000e+00 : f32
    %6 = vector.broadcast %cst_5 : f32 to vector<8x128xf32>
    %7 = arith.maximumf %5, %6 : vector<8x128xf32>
    %8 = arith.truncf %7 : vector<8x128xf32> to vector<8x128xbf16>
    %c0_6 = arith.constant 0 : index
    %c0_7 = arith.constant 0 : index
    %9 = vector.load %arg4[%c0_6, %c0_7] : memref<128x64xbf16, #tpu.memory_space<vmem>>, vector<128x64xbf16>
    %cst_8 = arith.constant dense<0.000000e+00> : vector<8x64xf32>
    %10 = tpu.matmul %8, %9, %cst_8 {dimension_numbers = #tpu.dot_dimension_numbers<[1], [0], [0], [1], [0, 0, 1, 1], [], []>} : vector<8x128xbf16>, vector<128x64xbf16>, vector<8x64xf32> -> vector<8x64xf32>
    %c0_9 = arith.constant 0 : index
    %c0_10 = arith.constant 0 : index
    %11 = vector.load %arg5[%c0_9, %c0_10] : memref<1x64xf32, #tpu.memory_space<vmem>>, vector<1x64xf32>
    %12 = vector.broadcast %11 : vector<1x64xf32> to vector<8x64xf32>
    %13 = arith.addf %10, %12 : vector<8x64xf32>
    %cst_11 = arith.constant 0.000000e+00 : f32
    %14 = vector.broadcast %cst_11 : f32 to vector<8x64xf32>
    %15 = arith.maximumf %13, %14 : vector<8x64xf32>
    %16 = arith.truncf %15 : vector<8x64xf32> to vector<8x64xbf16>
    %c0_12 = arith.constant 0 : index
    %c0_13 = arith.constant 0 : index
    %17 = vector.load %arg6[%c0_12, %c0_13] : memref<64x32xbf16, #tpu.memory_space<vmem>>, vector<64x32xbf16>
    %cst_14 = arith.constant dense<0.000000e+00> : vector<8x32xf32>
    %18 = tpu.matmul %16, %17, %cst_14 {dimension_numbers = #tpu.dot_dimension_numbers<[1], [0], [0], [1], [0, 0, 1, 1], [], []>} : vector<8x64xbf16>, vector<64x32xbf16>, vector<8x32xf32> -> vector<8x32xf32>
    %c0_15 = arith.constant 0 : index
    %c0_16 = arith.constant 0 : index
    %19 = vector.load %arg7[%c0_15, %c0_16] : memref<1x32xf32, #tpu.memory_space<vmem>>, vector<1x32xf32>
    %20 = vector.broadcast %19 : vector<1x32xf32> to vector<8x32xf32>
    %21 = arith.addf %18, %20 : vector<8x32xf32>
    %cst_17 = arith.constant 0.000000e+00 : f32
    %22 = vector.broadcast %cst_17 : f32 to vector<8x32xf32>
    %23 = arith.maximumf %21, %22 : vector<8x32xf32>
    %c0_18 = arith.constant 0 : index
    %c0_19 = arith.constant 0 : index
    %24 = vector.load %arg8[%c0_18, %c0_19] : memref<1x32xf32, #tpu.memory_space<vmem>>, vector<1x32xf32>
    %25 = vector.broadcast %24 : vector<1x32xf32> to vector<8x32xf32>
    %26 = arith.mulf %23, %25 : vector<8x32xf32>
    %cst_20 = arith.constant dense<0.000000e+00> : vector<8xf32>
    %27 = vector.multi_reduction <add>, %26, %cst_20 [1] : vector<8x32xf32> to vector<8xf32>
    %28 = vector.shape_cast %27 : vector<8xf32> to vector<8x1xf32>
    %c0_21 = arith.constant 0 : index
    %c0_22 = arith.constant 0 : index
    %29 = vector.load %arg9[%c0_21, %c0_22] : memref<1x1xf32, #tpu.memory_space<vmem>>, vector<1x1xf32>
    %30 = vector.broadcast %29 : vector<1x1xf32> to vector<8x1xf32>
    %31 = arith.addf %28, %30 : vector<8x1xf32>
    %c0_23 = arith.constant 0 : index
    %c0_24 = arith.constant 0 : index
    %32 = vector.load %arg10[%c0_23, %c0_24] : memref<8x1xf32, #tpu.memory_space<vmem>>, vector<8x1xf32>
    tpu.vector_store %arg10[%c0_23, %c0_24], %31 {strides = array<i32>} : memref<8x1xf32, #tpu.memory_space<vmem>>, vector<8x1xf32>,
    return
  }
  func.func @transform_0(%arg0: i32) -> (i32, i32) {
    %c0_i32 = arith.constant 0 : i32
    %c0_i32_0 = arith.constant 0 : i32
    return %arg0, %c0_i32 : i32, i32
  }
  func.func @transform_1(%arg0: i32) -> (i32, i32) {
    %c0_i32 = arith.constant 0 : i32
    %c0_i32_0 = arith.constant 0 : i32
    %c0_i32_1 = arith.constant 0 : i32
    return %c0_i32, %c0_i32_0 : i32, i32
  }
  func.func @transform_2(%arg0: i32) -> (i32, i32) {
    %c0_i32 = arith.constant 0 : i32
    %c0_i32_0 = arith.constant 0 : i32
    %c0_i32_1 = arith.constant 0 : i32
    return %c0_i32, %c0_i32_0 : i32, i32
  }
  func.func @transform_3(%arg0: i32) -> (i32, i32) {
    %c0_i32 = arith.constant 0 : i32
    %c0_i32_0 = arith.constant 0 : i32
    %c0_i32_1 = arith.constant 0 : i32
    return %c0_i32, %c0_i32_0 : i32, i32
  }
  func.func @transform_4(%arg0: i32) -> (i32, i32) {
    %c0_i32 = arith.constant 0 : i32
    %c0_i32_0 = arith.constant 0 : i32
    %c0_i32_1 = arith.constant 0 : i32
    return %c0_i32, %c0_i32_0 : i32, i32
  }
  func.func @transform_5(%arg0: i32) -> (i32, i32) {
    %c0_i32 = arith.constant 0 : i32
    %c0_i32_0 = arith.constant 0 : i32
    %c0_i32_1 = arith.constant 0 : i32
    return %c0_i32, %c0_i32_0 : i32, i32
  }
  func.func @transform_6(%arg0: i32) -> (i32, i32) {
    %c0_i32 = arith.constant 0 : i32
    %c0_i32_0 = arith.constant 0 : i32
    %c0_i32_1 = arith.constant 0 : i32
    return %c0_i32, %c0_i32_0 : i32, i32
  }
  func.func @transform_7(%arg0: i32) -> (i32, i32) {
    %c0_i32 = arith.constant 0 : i32
    %c0_i32_0 = arith.constant 0 : i32
    %c0_i32_1 = arith.constant 0 : i32
    return %c0_i32, %c0_i32_0 : i32, i32
  }
  func.func @transform_8(%arg0: i32) -> (i32, i32) {
    %c0_i32 = arith.constant 0 : i32
    %c0_i32_0 = arith.constant 0 : i32
    %c0_i32_1 = arith.constant 0 : i32
    return %c0_i32, %c0_i32_0 : i32, i32
  }
  func.func @transform_9(%arg0: i32) -> (i32, i32) {
    %c0_i32 = arith.constant 0 : i32
    %c0_i32_0 = arith.constant 0 : i32
    return %arg0, %c0_i32 : i32, i32
  }
}

</mosaic_0001>

<llo_original>
// kernel: tpu_custom_call.1
$region0: #{tpu_custom_call.1}
  #allocation0 [shape = 'u32[]', space=smem, size = 0x4, offset = 0x4, fixed_abs, tag = 'smem constant byte address 0x4 - core index']
  #allocation1 [shape = 'u32[144,128]{1,0:T(1,128)}', space=vmem, size = 0x12000, scoped, tag = 'internal scratch']
  #allocation2 [shape = 'f32[1,1]{1,0:T(1,128)S(1)}', space=vmem, size = 0x200, scoped, tag = 'scoped memory for tpu_custom_call.1']
  %s0 = inlined_call_operand.vmem [shape: bf16[8,66], index: 0, kind: input, shape index: {}]
  %s1 = inlined_call_operand.vmem [shape: bf16[66,128], index: 1, kind: input, shape index: {}]
  %s2 = inlined_call_operand.vmem [shape: f32[1,128], index: 2, kind: input, shape index: {}]
  %s3 = inlined_call_operand.vmem [shape: bf16[128,64], index: 3, kind: input, shape index: {}]
  %s4 = inlined_call_operand.vmem [shape: f32[1,64], index: 4, kind: input, shape index: {}]
  %s5 = inlined_call_operand.vmem [shape: bf16[64,32], index: 5, kind: input, shape index: {}]
  %s6 = inlined_call_operand.vmem [shape: f32[1,32], index: 6, kind: input, shape index: {}]
  %s7 = inlined_call_operand.vmem [shape: f32[1,32], index: 7, kind: input, shape index: {}]
  %s8 = inlined_call_operand.<no memory space> [shape: f32[1,1], index: 8, kind: input, shape index: {}]
  %s9 = inlined_call_operand.vmem [shape: f32[8,1], index: 9, kind: output, shape index: {}]
  %s10 = sld [smem:[#allocation0]]
  $region46: #{tpu_custom_call.1} parent=0
    _
  %s12 = ssub.s32 1, %s10
  %s13 = scalar_select 0, %s12, %s10
  %v14 = vstv %s8
  %15 = vst [vmem:[#allocation2] sm:$0x1] %v14
  // Predicated region
  $region2: #{tpu_custom_call.1} parent=0 // pred_check
    _
  $region3: #{tpu_custom_call.1} parent=0 // pred_check_branch
    %17 = sbr.rel (0) target = $region5
  $region4: #{tpu_custom_call.1} parent=0 // pred_region
    _
  $region5: #{tpu_custom_call.1} parent=0 // pred_fallthru
    _
  // Predicated region
  $region6: #{tpu_custom_call.1} parent=0 // pred_check
    _
  $region7: #{tpu_custom_call.1} parent=0 // pred_check_branch
    %19 = sbr.rel (0) target = $region9
  $region8: #{tpu_custom_call.1} parent=0 // pred_region
    _
  $region9: #{tpu_custom_call.1} parent=0 // pred_fallthru
    _
  // Predicated region
  $region10: #{tpu_custom_call.1} parent=0 // pred_check
    _
  $region11: #{tpu_custom_call.1} parent=0 // pred_check_branch
    %21 = sbr.rel (0) target = $region13
  $region12: #{tpu_custom_call.1} parent=0 // pred_region
    _
  $region13: #{tpu_custom_call.1} parent=0 // pred_fallthru
    _
  // Predicated region
  $region14: #{tpu_custom_call.1} parent=0 // pred_check
    _
  $region15: #{tpu_custom_call.1} parent=0 // pred_check_branch
    %23 = sbr.rel (0) target = $region17
  $region16: #{tpu_custom_call.1} parent=0 // pred_region
    _
  $region17: #{tpu_custom_call.1} parent=0 // pred_fallthru
    _
  // Predicated region
  $region18: #{tpu_custom_call.1} parent=0 // pred_check
    _
  $region19: #{tpu_custom_call.1} parent=0 // pred_check_branch
    %25 = sbr.rel (0) target = $region21
  $region20: #{tpu_custom_call.1} parent=0 // pred_region
    _
  $region21: #{tpu_custom_call.1} parent=0 // pred_fallthru
    _
  // Predicated region
  $region22: #{tpu_custom_call.1} parent=0 // pred_check
    _
  $region23: #{tpu_custom_call.1} parent=0 // pred_check_branch
    %27 = sbr.rel (0) target = $region25
  $region24: #{tpu_custom_call.1} parent=0 // pred_region
    _
  $region25: #{tpu_custom_call.1} parent=0 // pred_fallthru
    _
  // Predicated region
  $region26: #{tpu_custom_call.1} parent=0 // pred_check
    _
  $region27: #{tpu_custom_call.1} parent=0 // pred_check_branch
    %29 = sbr.rel (0) target = $region29
  $region28: #{tpu_custom_call.1} parent=0 // pred_region
    _
  $region29: #{tpu_custom_call.1} parent=0 // pred_fallthru
    _
  // Predicated region
  $region30: #{tpu_custom_call.1} parent=0 // pred_check
    _
  $region31: #{tpu_custom_call.1} parent=0 // pred_check_branch
    %31 = sbr.rel (0) target = $region33
  $region32: #{tpu_custom_call.1} parent=0 // pred_region
    _
  $region33: #{tpu_custom_call.1} parent=0 // pred_fallthru
    _
  // Predicated region
  $region34: #{tpu_custom_call.1} parent=0 // pred_check
    _
  $region35: #{tpu_custom_call.1} parent=0 // pred_check_branch
    %33 = sbr.rel (0) target = $region37
  $region36: #{tpu_custom_call.1} parent=0 // pred_region
    _
  $region37: #{tpu_custom_call.1} parent=0 // pred_fallthru
    _
  %v35 = vld [vmem:[%s0] sm:$0xf]
  %v36 = vld [vmem:[%s1] sm:$0xf]
  %v37 = vld [vmem:[%s1 + $0x4] sm:$0xf]
  %v38 = vld [vmem:[%s1 + $0x8] sm:$0xf]
  %v39 = vld [vmem:[%s1 + $0xc] sm:$0xf]
  %v40 = vld [vmem:[%s1 + $0x10] sm:$0xf]
  %v41 = vld [vmem:[%s1 + $0x14] sm:$0xf]
  %v42 = vld [vmem:[%s1 + $0x18] sm:$0xf]
  %v43 = vld [vmem:[%s1 + $0x1c] sm:$0xf]
  %v44 = vld [vmem:[%s1 + $0x20] sm:$0x1]
  %v45 = vld [vmem:[%s2] sm:$0x1]
  %v47 = vlaneseq
  %v48 = vshrl.u32 %v47, 7
  %v49 = vsub.s32 0, %v48
  %v50 = vrot.slane %v45, %v49
  %v61 = vunpack.c.l.b16 %v36
  %v62 = vunpack.c.l.b16 %v37
  %v63 = vunpack.c.l.b16 %v38
  %v64 = vunpack.c.l.b16 %v39
  %v65 = vunpack.c.l.b16 %v40
  %v66 = vunpack.c.l.b16 %v41
  %v67 = vunpack.c.l.b16 %v42
  %v68 = vunpack.c.l.b16 %v43
  %v69 = vunpack.c.l.b16 %v44
  %v70 = vpack.c.b16 %v62, %v61
  %v71 = vpack.c.b16 %v64, %v63
  %v72 = vpack.c.b16 %v66, %v65
  %v73 = vpack.c.b16 %v68, %v67
  %v74 = vpack.c.b16 %v69, %v69
  %vm79 = vcmask 539648
  %v81 = vsel %vm79, %v35, 0
  %vm83 = vcmask 1040384
  %v85 = vsel %vm83, %v74, 0
  %87 = vmatprep.subr.bf16.mxu0 0
  %88 = vmatpush1.bf16.msra.mxu0 0
  %89 = vmatprep.subr.bf16.mxu0 0
  %90 = vmatpush1.bf16.msra.mxu0 0
  %91 = vmatprep.subr.bf16.mxu0 0
  %92 = vmatpush1.bf16.msra.mxu0 0
  %93 = vmatprep.subr.bf16.mxu0 0
  %94 = vmatpush1.bf16.msra.mxu0 %v85
  %95 = vmatprep.subr.bf16.mxu0 0
  %96 = vmatpush1.bf16.msra.mxu0 %v73
  %97 = vmatprep.subr.bf16.mxu0 0
  %98 = vmatpush1.bf16.msra.mxu0 %v72
  %99 = vmatprep.subr.bf16.mxu0 0
  %100 = vmatpush1.bf16.msra.mxu0 %v71
  %101 = vmatprep.subr.bf16.mxu0 0
  %102 = vmatpush1.bf16.msra.mxu0 %v70
  %103 = vmatprep.subr.bf16.mxu0 0
  %104 = vmatpush2.bf16.msra.mxu0 0
  %105 = vmatprep.subr.bf16.mxu0 0
  %106 = vmatpush2.bf16.msra.mxu0 0
  %107 = vmatprep.subr.bf16.mxu0 0
  %108 = vmatpush2.bf16.msra.mxu0 0
  %109 = vmatprep.subr.bf16.mxu0 0
  %110 = vmatpush2.bf16.msra.mxu0 0
  %111 = vmatprep.subr.bf16.mxu0 0
  %112 = vmatpush2.bf16.msra.mxu0 0
  %113 = vmatprep.subr.bf16.mxu0 0
  %114 = vmatpush2.bf16.msra.mxu0 0
  %115 = vmatprep.subr.bf16.mxu0 0
  %116 = vmatpush2.bf16.msra.mxu0 0
  %117 = vmatprep.subr.bf16.mxu0 0
  %118 = vmatpush2.bf16.msra.mxu0 0
  %119 = vmatprep.mubr.bf16.mxu0 0
  %120 = vmatmul.mubr.bf16.gmra.mxu0 %v81
  %v121 = vpop.f32.mrf.mxu0
  %v122 = vadd.f32 %v50, %v121
  %v123 = vpop.f32.mrf.mxu0
  %v124 = vpop.f32.mrf.mxu0
  %v125 = vpop.f32.mrf.mxu0
  %126 = vdwg.mxu0
  %v127 = vmax.f32 %v122, 0.0
  %v128 = vpack.c.bf16 %v127, %v127
  %v129 = vld [vmem:[%s3] sm:$0xf]
  %v130 = vld [vmem:[%s3 + $0x4] sm:$0xf]
  %v131 = vld [vmem:[%s3 + $0x8] sm:$0xf]
  %v132 = vld [vmem:[%s3 + $0xc] sm:$0xf]
  %v133 = vld [vmem:[%s3 + $0x10] sm:$0xf]
  %v134 = vld [vmem:[%s3 + $0x14] sm:$0xf]
  %v135 = vld [vmem:[%s3 + $0x18] sm:$0xf]
  %v136 = vld [vmem:[%s3 + $0x1c] sm:$0xf]
  %v137 = vld [vmem:[%s3 + $0x20] sm:$0xf]
  %v138 = vld [vmem:[%s3 + $0x24] sm:$0xf]
  %v139 = vld [vmem:[%s3 + $0x28] sm:$0xf]
  %v140 = vld [vmem:[%s3 + $0x2c] sm:$0xf]
  %v141 = vld [vmem:[%s3 + $0x30] sm:$0xf]
  %v142 = vld [vmem:[%s3 + $0x34] sm:$0xf]
  %v143 = vld [vmem:[%s3 + $0x38] sm:$0xf]
  %v144 = vld [vmem:[%s3 + $0x3c] sm:$0xf]
  %v145 = vld [vmem:[%s4] sm:$0x1]
  %v147 = vlaneseq
  %v148 = vshrl.u32 %v147, 7
  %v149 = vsub.s32 0, %v148
  %v150 = vrot.slane %v145, %v149
  %v168 = vunpack.c.l.b16 %v129
  %v169 = vunpack.c.l.b16 %v130
  %v170 = vunpack.c.l.b16 %v131
  %v171 = vunpack.c.l.b16 %v132
  %v172 = vunpack.c.l.b16 %v133
  %v173 = vunpack.c.l.b16 %v134
  %v174 = vunpack.c.l.b16 %v135
  %v175 = vunpack.c.l.b16 %v136
  %v176 = vunpack.c.l.b16 %v137
  %v177 = vunpack.c.l.b16 %v138
  %v178 = vunpack.c.l.b16 %v139
  %v179 = vunpack.c.l.b16 %v140
  %v180 = vunpack.c.l.b16 %v141
  %v181 = vunpack.c.l.b16 %v142
  %v182 = vunpack.c.l.b16 %v143
  %v183 = vunpack.c.l.b16 %v144
  %v184 = vpack.c.b16 %v169, %v168
  %v185 = vpack.c.b16 %v171, %v170
  %v186 = vpack.c.b16 %v173, %v172
  %v187 = vpack.c.b16 %v175, %v174
  %v188 = vpack.c.b16 %v177, %v176
  %v189 = vpack.c.b16 %v179, %v178
  %v190 = vpack.c.b16 %v181, %v180
  %v191 = vpack.c.b16 %v183, %v182
  %200 = vmatprep.subr.bf16.mxu0 0
  %201 = vmatpush1.bf16.msra.mxu0 %v191
  %202 = vmatprep.subr.bf16.mxu0 0
  %203 = vmatpush1.bf16.msra.mxu0 %v190
  %204 = vmatprep.subr.bf16.mxu0 0
  %205 = vmatpush1.bf16.msra.mxu0 %v189
  %206 = vmatprep.subr.bf16.mxu0 0
  %207 = vmatpush1.bf16.msra.mxu0 %v188
  %208 = vmatprep.subr.bf16.mxu0 0
  %209 = vmatpush1.bf16.msra.mxu0 %v187
  %210 = vmatprep.subr.bf16.mxu0 0
  %211 = vmatpush1.bf16.msra.mxu0 %v186
  %212 = vmatprep.subr.bf16.mxu0 0
  %213 = vmatpush1.bf16.msra.mxu0 %v185
  %214 = vmatprep.subr.bf16.mxu0 0
  %215 = vmatpush1.bf16.msra.mxu0 %v184
  %216 = vmatprep.subr.bf16.mxu0 0
  %217 = vmatpush2.bf16.msra.mxu0 0
  %218 = vmatprep.subr.bf16.mxu0 0
  %219 = vmatpush2.bf16.msra.mxu0 0
  %220 = vmatprep.subr.bf16.mxu0 0
  %221 = vmatpush2.bf16.msra.mxu0 0
  %222 = vmatprep.subr.bf16.mxu0 0
  %223 = vmatpush2.bf16.msra.mxu0 0
  %224 = vmatprep.subr.bf16.mxu0 0
  %225 = vmatpush2.bf16.msra.mxu0 0
  %226 = vmatprep.subr.bf16.mxu0 0
  %227 = vmatpush2.bf16.msra.mxu0 0
  %228 = vmatprep.subr.bf16.mxu0 0
  %229 = vmatpush2.bf16.msra.mxu0 0
  %230 = vmatprep.subr.bf16.mxu0 0
  %231 = vmatpush2.bf16.msra.mxu0 0
  %232 = vmatprep.mubr.bf16.mxu0 0
  %233 = vmatmul.mubr.bf16.gmra.mxu0 %v128
  %v234 = vpop.f32.mrf.mxu0
  %v235 = vadd.f32 %v150, %v234
  %v236 = vpop.f32.mrf.mxu0
  %v237 = vpop.f32.mrf.mxu0
  %v238 = vpop.f32.mrf.mxu0
  %239 = vdwg.mxu0
  %v240 = vmax.f32 %v235, 0.0
  %v241 = vpack.c.bf16 %v240, %v240
  %v242 = vld [vmem:[%s5] sm:$0xf]
  %v243 = vld [vmem:[%s5 + $0x4] sm:$0xf]
  %v244 = vld [vmem:[%s5 + $0x8] sm:$0xf]
  %v245 = vld [vmem:[%s5 + $0xc] sm:$0xf]
  %v246 = vld [vmem:[%s5 + $0x10] sm:$0xf]
  %v247 = vld [vmem:[%s5 + $0x14] sm:$0xf]
  %v248 = vld [vmem:[%s5 + $0x18] sm:$0xf]
  %v249 = vld [vmem:[%s5 + $0x1c] sm:$0xf]
  %v250 = vld [vmem:[%s6] sm:$0x1]
  %v252 = vlaneseq
  %v253 = vshrl.u32 %v252, 7
  %v254 = vsub.s32 0, %v253
  %v255 = vrot.slane %v250, %v254
  %v265 = vunpack.c.l.b16 %v242
  %v266 = vunpack.c.l.b16 %v243
  %v267 = vunpack.c.l.b16 %v244
  %v268 = vunpack.c.l.b16 %v245
  %v269 = vunpack.c.l.b16 %v246
  %v270 = vunpack.c.l.b16 %v247
  %v271 = vunpack.c.l.b16 %v248
  %v272 = vunpack.c.l.b16 %v249
  %v273 = vpack.c.b16 %v266, %v265
  %v274 = vpack.c.b16 %v268, %v267
  %v275 = vpack.c.b16 %v270, %v269
  %v276 = vpack.c.b16 %v272, %v271
  %vm281 = vcmask 523264
  %v283 = vsel %vm281, %v241, 0
  %285 = vmatprep.subr.bf16.mxu0 0
  %286 = vmatpush1.bf16.msra.mxu0 0
  %287 = vmatprep.subr.bf16.mxu0 0
  %288 = vmatpush1.bf16.msra.mxu0 0
  %289 = vmatprep.subr.bf16.mxu0 0
  %290 = vmatpush1.bf16.msra.mxu0 0
  %291 = vmatprep.subr.bf16.mxu0 0
  %292 = vmatpush1.bf16.msra.mxu0 0
  %293 = vmatprep.subr.bf16.mxu0 0
  %294 = vmatpush1.bf16.msra.mxu0 %v276
  %295 = vmatprep.subr.bf16.mxu0 0
  %296 = vmatpush1.bf16.msra.mxu0 %v275
  %297 = vmatprep.subr.bf16.mxu0 0
  %298 = vmatpush1.bf16.msra.mxu0 %v274
  %299 = vmatprep.subr.bf16.mxu0 0
  %300 = vmatpush1.bf16.msra.mxu0 %v273
  %301 = vmatprep.subr.bf16.mxu0 0
  %302 = vmatpush2.bf16.msra.mxu0 0
  %303 = vmatprep.subr.bf16.mxu0 0
  %304 = vmatpush2.bf16.msra.mxu0 0
  %305 = vmatprep.subr.bf16.mxu0 0
  %306 = vmatpush2.bf16.msra.mxu0 0
  %307 = vmatprep.subr.bf16.mxu0 0
  %308 = vmatpush2.bf16.msra.mxu0 0
  %309 = vmatprep.subr.bf16.mxu0 0
  %310 = vmatpush2.bf16.msra.mxu0 0
  %311 = vmatprep.subr.bf16.mxu0 0
  %312 = vmatpush2.bf16.msra.mxu0 0
  %313 = vmatprep.subr.bf16.mxu0 0
  %314 = vmatpush2.bf16.msra.mxu0 0
  %315 = vmatprep.subr.bf16.mxu0 0
  %316 = vmatpush2.bf16.msra.mxu0 0
  %317 = vmatprep.mubr.bf16.mxu0 0
  %318 = vmatmul.mubr.bf16.gmra.mxu0 %v283
  %v319 = vpop.f32.mrf.mxu0
  %v320 = vadd.f32 %v255, %v319
  %v321 = vpop.f32.mrf.mxu0
  %v322 = vpop.f32.mrf.mxu0
  %v323 = vpop.f32.mrf.mxu0
  %324 = vdwg.mxu0
  %v325 = vmax.f32 %v320, 0.0
  %v326 = vld [vmem:[%s7] sm:$0x1]
  %v328 = vlaneseq
  %v329 = vshrl.u32 %v328, 7
  %v330 = vsub.s32 0, %v329
  %v331 = vrot.slane %v326, %v330
  %v333 = vmul.f32 %v325, %v331
  %vm334 = vcmask 261120
  %v335 = vsel %vm334, %v333, 0.0
  %336 = vadd.xlane.f32.xlu0 %v335
  %v337 = vpop.xlane.xlu0 %336
  %v338 = vld [vmem:[#allocation2] sm:$0x1]
  %v340 = vlaneseq
  %v341 = vshrl.u32 %v340, 7
  %v342 = vsub.s32 0, %v341
  %v343 = vrot.slane %v338, %v342
  %v345 = vadd.f32 %v337, %v343
  %vm346 = vcmask 7168
  %347 = vst.msk [vmem:[%s9] sm:$0xff] %vm346, %v345
  // Predicated region
  $region38: #{tpu_custom_call.1} parent=0 // pred_check
    _
  $region39: #{tpu_custom_call.1} parent=0 // pred_check_branch
    %349 = sbr.rel (0) target = $region41
  $region40: #{tpu_custom_call.1} parent=0 // pred_region
    _
  $region41: #{tpu_custom_call.1} parent=0 // pred_fallthru
    _
  // Predicated region
  $region42: #{tpu_custom_call.1} parent=0 // pred_check
    _
  $region43: #{tpu_custom_call.1} parent=0 // pred_check_branch
    %351 = sbr.rel (0) target = $region45
  $region44: #{tpu_custom_call.1} parent=0 // pred_region
    _
  $region45: #{tpu_custom_call.1} parent=0 // pred_fallthru
    _

</llo_original>
